<compile_context>
chip_gen: v7x
topology: tpu7x:2x2x1
jax: 0.10.0
libtpu: 0.0.40
codegen_flags: <defaults>
</compile_context>

<pallas_src>
import jax
import jax.numpy as jnp
from jax.experimental import pallas as pl
from jax.experimental.pallas import tpu as pltpu


# --------------------------------------------------------------------------
# Kernel
# --------------------------------------------------------------------------
def _make_attention_kernel(*, approx_recip, awc_on_mxu):
    def _attention_kernel(enc_ref, att2b_ref, w1t_ref, w3_ref, awc_ref, alpha_ref):
        # Per-grid-step views:
        #   enc_ref   : (TB, P, E)  encoder_out tile (matmul dtype)
        #   att2b_ref : (TB, A)     prev_hidden @ w2.T + b2 + b1 (f32)
        #   w1t_ref   : (E, A)      encoder_att weight, pre-transposed
        #   w3_ref    : (1, A)      full_att weight as a row (VPU path)
        #   awc_ref   : (TB, E)     weighted encoding (sublane/lane-dense)
        #   alpha_ref : (TB, P)     attention weights (sublane/lane-dense)
        TB, P, E = enc_ref.shape
        A = w1t_ref.shape[1]

        enc = enc_ref[...]                                   # (TB, P, E)

        # One batch-fused MXU GEMM.  tb is sublane-aligned; the reshape is a
        # free view when P is a multiple of 8 (true for typical 14x14=196?
        # no -> see wrapper note; here P=16 so it is free).
        att1 = jnp.dot(
            enc.reshape(TB * P, E),
            w1t_ref[...],
            preferred_element_type=jnp.float32,
        ).reshape(TB, P, A)                                  # (TB, P, A) f32

        # relu(att1 + rnn projection); att2b broadcasts over the pixel axis.
        h = jnp.maximum(att1 + att2b_ref[...][:, None, :], 0.0)

        # full_att (A -> 1) as VPU multiply + cross-lane reduce.
        # (An (A, 1) MXU matmul would waste columns; b3 cancels in softmax.)
        att = jnp.sum(h * w3_ref[...].reshape(1, 1, A), axis=-1)   # (TB, P)

        # softmax over pixels (lane axis)
        m = jnp.max(att, axis=-1, keepdims=True)
        e = jnp.exp(att - m)
        denom = jnp.sum(e, axis=-1, keepdims=True)
        # approx=True uses the otherwise-idle EUP slot (production); exact
        # divide kept as the default for the 1e-5 reference check.
        alpha = e * pl.reciprocal(denom, approx=approx_recip)      # (TB, P)

        # attention-weighted encoding: sum_p enc[b, p, :] * alpha[b, p]
        if awc_on_mxu:
            # Batched MXU contraction (M=1 per batch) -- use when profiling
            # shows the VALU slot saturating at large E.
            awc = jax.lax.dot_general(
                alpha[:, None, :].astype(enc.dtype), enc,
                (((2,), (1,)), ((0,), (0,))),
                preferred_element_type=jnp.float32,
            )[:, 0, :]                                             # (TB, E)
        else:
            enc_f32 = enc.astype(jnp.float32)   # no-op when already f32
            awc = jnp.sum(enc_f32 * alpha[:, :, None], axis=1)     # (TB, E)

        awc_ref[...] = awc
        alpha_ref[...] = alpha

    return _attention_kernel


# --------------------------------------------------------------------------
# Generation-aware sizing
# --------------------------------------------------------------------------
def _round_up(x, m):
    return ((x + m - 1) // m) * m


def _tpu_generation():
    try:
        kind = jax.devices()[0].device_kind.lower()
    except Exception:
        return "other"
    if "v5 lite" in kind or "v5lite" in kind or "v5e" in kind:
        return "v5e"
    if "v6" in kind:
        return "v6e"
    if "v7" in kind or "7x" in kind:
        return "v7x"
    return "other"


# gen -> (vmem_limit_bytes for CompilerParams, VMEM budget used for tiling)
_VMEM_PLAN = {
    "v5e": (96 << 20, 72 << 20),    # 128 MiB physical, 16 MiB default scoped
    "v6e": (96 << 20, 80 << 20),    # 128 MiB physical, 32 MiB default scoped
    "v7x": (48 << 20, 36 << 20),    # 64 MiB physical per TensorCore
    "other": (None, 24 << 20),      # conservative / unknown chip
}


def _choose_batch_tile(B, P, E, A, *, gen, matmul_itemsize, vmem_budget_bytes):
    """Batch elements per grid step (amortizes ~0.35us/step; fills MXU rows)."""
    f32 = 4
    # Per batch element: double-buffered enc block + att2b row + f32
    # intermediates (att1 / relu) + double-buffered outputs.
    per_b = (2 * P * E * matmul_itemsize
             + 2 * A * f32
             + 2 * P * A * f32
             + 2 * (E + P) * f32)
    # Resident weights (w1^T, w3) are double-buffered by the default pipeliner.
    resident = 2 * (E * A * matmul_itemsize + A * f32)
    budget = max(vmem_budget_bytes - resident, per_b)
    tb_budget = max(1, int(budget // per_b))

    pack = 8 if matmul_itemsize >= 4 else 16        # sublane packing
    mxu_rows = 128 if gen == "v5e" else 256          # MXU row dim

    b_pad = _round_up(B, pack)

    # Largest sublane-aligned tile that fits the budget.
    tb = max(pack, (tb_budget // pack) * pack)
    # Fill MXU rows (tb * P >= mxu_rows) when the budget allows.
    want = _round_up(max(1, -(-mxu_rows // P)), pack)
    if want <= tb_budget:
        tb = max(tb, want)
    # Never bigger than the (padded) batch.
    tb = min(tb, b_pad)
    # v7x has two TensorCores: keep >= 2 grid steps when the batch allows;
    # on the single-TC chips (v5e/v6e) extra steps are pure overhead.
    if gen == "v7x" and b_pad >= 2 * pack:
        tb = min(tb, _round_up(-(-b_pad // 2), pack))
    return tb


# --------------------------------------------------------------------------
# Wrapper
# --------------------------------------------------------------------------
def attention_forward(encoder_out, prev_hidden, params, *, tb=None,
                      matmul_dtype=jnp.float32, approx_recip=False,
                      awc_on_mxu=False):
    """encoder_out: (B, P, E) f32, prev_hidden: (B, R) f32.

    Returns (attention_weighted_encoding (B, E), alpha (B, P)).

    Production settings on v6e/v7x: matmul_dtype=jnp.bfloat16 (casts enc/w1^T
    at the pallas_call boundary -> half the HBM/VMEM for the dominant block
    and native bf16 MXU) and approx_recip=True.  Defaults stay exact-f32 so
    the 1e-5 reference check passes.
    """
    B, P, E = encoder_out.shape
    A = params["w1"].shape[0]
    gen = _tpu_generation()
    itemsize = jnp.dtype(matmul_dtype).itemsize
    vmem_limit, tile_budget = _VMEM_PLAN.get(gen, _VMEM_PLAN["other"])

    # Hoist the rnn_att projection out of the kernel (degenerate M=1 matmul):
    # one batched XLA GEMM; fold b1 so the kernel adds a single bias row.
    att2b = (prev_hidden @ params["w2"].T + params["b2"] + params["b1"]
             ).astype(jnp.float32)                                   # (B, A)

    w1t = params["w1"].T.astype(matmul_dtype)                        # (E, A)
    w3row = params["w3"].reshape(1, A).astype(jnp.float32)           # (1, A)
    # b3 intentionally dropped: constant shift before softmax is a no-op.

    # Cast at the boundary so the DMA'd enc block is already matmul_dtype.
    enc_in = encoder_out.astype(matmul_dtype)                        # (B, P, E)
    # NOTE: if P is not a multiple of 8 (e.g. 196), the in-kernel
    # (tb*P, E) reshape materializes a VMEM copy; pad/mask P upstream to
    # remove it at production shapes.

    if tb is None:
        tb = _choose_batch_tile(B, P, E, A, gen=gen,
                                matmul_itemsize=itemsize,
                                vmem_budget_bytes=tile_budget)
    Bp = _round_up(B, tb)
    if Bp != B:                                   # pad batch to a tb multiple
        pad = Bp - B
        enc_in = jnp.concatenate(
            [enc_in, jnp.zeros((pad, P, E), enc_in.dtype)], axis=0)
        att2b = jnp.concatenate(
            [att2b, jnp.zeros((pad, A), att2b.dtype)], axis=0)

    grid_spec = pltpu.PrefetchScalarGridSpec(
        num_scalar_prefetch=0,
        grid=(Bp // tb,),
        in_specs=[
            pl.BlockSpec((tb, P, E), lambda b: (b, 0, 0)),   # encoder_out tile
            pl.BlockSpec((tb, A), lambda b: (b, 0)),         # rnn proj + biases
            pl.BlockSpec((E, A), lambda b: (0, 0)),          # w1^T (resident)
            pl.BlockSpec((1, A), lambda b: (0, 0)),          # w3 row (resident)
        ],
        out_specs=[
            pl.BlockSpec((tb, E), lambda b: (b, 0)),         # weighted encoding
            pl.BlockSpec((tb, P), lambda b: (b, 0)),         # alpha
        ],
    )

    # Advisory cost estimate so XLA schedules surrounding ops sensibly.
    cost = pl.CostEstimate(
        flops=int(2 * Bp * P * E * A          # encoder_att GEMM
                  + 4 * Bp * P * A            # bias add + relu + full_att mult/sum
                  + 2 * Bp * P * E            # weighted-encoding reduction
                  + 4 * Bp * P),              # softmax adds/muls
        transcendentals=int(Bp * P),          # exp
        bytes_accessed=int(Bp * P * E * itemsize + Bp * A * 4
                           + E * A * itemsize + A * 4
                           + Bp * E * 4 + Bp * P * 4),
    )

    cp_kwargs = dict(dimension_semantics=("parallel",))
    if vmem_limit is not None:
        cp_kwargs["vmem_limit_bytes"] = int(vmem_limit)

    awc, alpha = pl.pallas_call(
        _make_attention_kernel(approx_recip=approx_recip, awc_on_mxu=awc_on_mxu),
        grid_spec=grid_spec,
        out_shape=(
            jax.ShapeDtypeStruct((Bp, E), jnp.float32),
            jax.ShapeDtypeStruct((Bp, P), jnp.float32),
        ),
        compiler_params=pltpu.CompilerParams(**cp_kwargs),
        cost_estimate=cost,
    )(enc_in, att2b, w1t, w3row)

    return awc[:B], alpha[:B]


# --------------------------------------------------------------------------
# Reference + init
# --------------------------------------------------------------------------
def _reference_forward(encoder_out, prev_hidden, params):
    att1 = encoder_out @ params["w1"].T + params["b1"]               # (B, P, A)
    att2 = prev_hidden @ params["w2"].T + params["b2"]               # (B, A)
    h = jax.nn.relu(att1 + att2[:, None, :])
    att = (h @ params["w3"].T + params["b3"]).squeeze(2)             # (B, P)
    alpha = jax.nn.softmax(att, axis=1)
    awc = (encoder_out * alpha[:, :, None]).sum(axis=1)              # (B, E)
    return awc, alpha


def init_params(key, encoder_channels, rnn_channels, attention_channels):
    """Deterministic init mimicking nn.Linear's uniform(-1/sqrt(fan_in), ...)."""
    ks = jax.random.split(key, 6)

    def lin(kw, kb, out_c, in_c):
        bound = 1.0 / jnp.sqrt(in_c)
        w = jax.random.uniform(kw, (out_c, in_c), jnp.float32, -bound, bound)
        b = jax.random.uniform(kb, (out_c,), jnp.float32, -bound, bound)
        return w, b

    w1, b1 = lin(ks[0], ks[1], attention_channels, encoder_channels)
    w2, b2 = lin(ks[2], ks[3], attention_channels, rnn_channels)
    w3, b3 = lin(ks[4], ks[5], 1, attention_channels)
    return {"w1": w1, "b1": b1, "w2": w2, "b2": b2, "w3": w3, "b3": b3}


if __name__ == "__main__":
    B, P = 2, 16                 # batch_size, num_pixels
    E, R, A = 32, 24, 48         # encoder, rnn, attention channels

    key = jax.random.PRNGKey(0)
    k_enc, k_hid, k_par = jax.random.split(key, 3)
    encoder_out = jax.random.normal(k_enc, (B, P, E), jnp.float32)
    prev_hidden = jax.random.normal(k_hid, (B, R), jnp.float32)
    params = init_params(k_par, E, R, A)

    awc, alpha = attention_forward(encoder_out, prev_hidden, params)
    jax.block_until_ready((awc, alpha))

    awc_ref, alpha_ref = _reference_forward(encoder_out, prev_hidden, params)
    assert awc.shape == (B, E) and alpha.shape == (B, P)
    assert jnp.allclose(awc, awc_ref, atol=1e-5, rtol=1e-5)
    assert jnp.allclose(alpha, alpha_ref, atol=1e-5, rtol=1e-5)
    assert jnp.allclose(alpha.sum(axis=1), 1.0, atol=1e-5)

    print("KERNEL_OK")
</pallas_src>

<mosaic_0001>
module attributes {stable_mosaic.version = 11 : i64} {
  func.func @_attention_kernel(%arg0: i32, %arg1: memref<8x16x32xf32, #tpu.memory_space<vmem>>, %arg2: memref<8x48xf32, #tpu.memory_space<vmem>>, %arg3: memref<32x48xf32, #tpu.memory_space<vmem>>, %arg4: memref<1x48xf32, #tpu.memory_space<vmem>>, %arg5: memref<8x32xf32, #tpu.memory_space<vmem>>, %arg6: memref<8x16xf32, #tpu.memory_space<vmem>>) attributes {dimension_semantics = [#tpu.dimension_semantics<parallel>], iteration_bounds = array<i64: 1>, scalar_prefetch = 0 : i64, scratch_operands = 0 : i64, tpu.core_type = #tpu.core_type<tc>, window_params = [{transform_indices = @transform_0, window_bounds = array<i64: 8, 16, 32>}, {transform_indices = @transform_1, window_bounds = array<i64: 8, 48>}, {pipeline_mode = #tpu.pipeline_mode<synchronous>, transform_indices = @transform_2, window_bounds = array<i64: 32, 48>}, {pipeline_mode = #tpu.pipeline_mode<synchronous>, transform_indices = @transform_3, window_bounds = array<i64: 1, 48>}, {transform_indices = @transform_4, window_bounds = array<i64: 8, 32>}, {transform_indices = @transform_5, window_bounds = array<i64: 8, 16>}]} {
    %c0 = arith.constant 0 : index
    %c0_0 = arith.constant 0 : index
    %c0_1 = arith.constant 0 : index
    %0 = vector.load %arg1[%c0, %c0_0, %c0_1] : memref<8x16x32xf32, #tpu.memory_space<vmem>>, vector<8x16x32xf32>
    %1 = vector.shape_cast %0 : vector<8x16x32xf32> to vector<128x32xf32>
    %c0_2 = arith.constant 0 : index
    %c0_3 = arith.constant 0 : index
    %2 = vector.load %arg3[%c0_2, %c0_3] : memref<32x48xf32, #tpu.memory_space<vmem>>, vector<32x48xf32>
    %cst = arith.constant dense<0.000000e+00> : vector<128x48xf32>
    %3 = tpu.matmul %1, %2, %cst {dimension_numbers = #tpu.dot_dimension_numbers<[1], [0], [0], [1], [0, 0, 1, 1], [], []>} : vector<128x32xf32>, vector<32x48xf32>, vector<128x48xf32> -> vector<128x48xf32>
    %4 = vector.shape_cast %3 : vector<128x48xf32> to vector<8x16x48xf32>
    %c0_4 = arith.constant 0 : index
    %c0_5 = arith.constant 0 : index
    %5 = vector.load %arg2[%c0_4, %c0_5] : memref<8x48xf32, #tpu.memory_space<vmem>>, vector<8x48xf32>
    %6 = vector.shape_cast %5 : vector<8x48xf32> to vector<8x1x48xf32>
    %7 = vector.broadcast %6 : vector<8x1x48xf32> to vector<8x16x48xf32>
    %8 = arith.addf %4, %7 : vector<8x16x48xf32>
    %cst_6 = arith.constant 0.000000e+00 : f32
    %9 = vector.broadcast %cst_6 : f32 to vector<8x16x48xf32>
    %10 = arith.maximumf %8, %9 : vector<8x16x48xf32>
    %c0_7 = arith.constant 0 : index
    %c0_8 = arith.constant 0 : index
    %11 = vector.load %arg4[%c0_7, %c0_8] : memref<1x48xf32, #tpu.memory_space<vmem>>, vector<1x48xf32>
    %12 = vector.shape_cast %11 : vector<1x48xf32> to vector<1x1x48xf32>
    %13 = vector.broadcast %12 : vector<1x1x48xf32> to vector<8x16x48xf32>
    %14 = arith.mulf %10, %13 : vector<8x16x48xf32>
    %cst_9 = arith.constant dense<0.000000e+00> : vector<8x16xf32>
    %15 = vector.multi_reduction <add>, %14, %cst_9 [2] : vector<8x16x48xf32> to vector<8x16xf32>
    %cst_10 = arith.constant dense<0xFF800000> : vector<8xf32>
    %16 = vector.multi_reduction <maximumf>, %15, %cst_10 [1] : vector<8x16xf32> to vector<8xf32>
    %17 = vector.shape_cast %16 : vector<8xf32> to vector<8x1xf32>
    %18 = vector.broadcast %17 : vector<8x1xf32> to vector<8x16xf32>
    %19 = arith.subf %15, %18 : vector<8x16xf32>
    %20 = math.exp %19 : vector<8x16xf32>
    %cst_11 = arith.constant dense<0.000000e+00> : vector<8xf32>
    %21 = vector.multi_reduction <add>, %20, %cst_11 [1] : vector<8x16xf32> to vector<8xf32>
    %22 = vector.shape_cast %21 : vector<8xf32> to vector<8x1xf32>
    %23 = tpu.reciprocal %22 : vector<8x1xf32> -> vector<8x1xf32>
    %24 = vector.broadcast %23 : vector<8x1xf32> to vector<8x16xf32>
    %25 = arith.mulf %20, %24 : vector<8x16xf32>
    %26 = vector.shape_cast %25 : vector<8x16xf32> to vector<8x16x1xf32>
    %27 = vector.broadcast %26 : vector<8x16x1xf32> to vector<8x16x32xf32>
    %28 = arith.mulf %0, %27 : vector<8x16x32xf32>
    %cst_12 = arith.constant dense<0.000000e+00> : vector<8x32xf32>
    %29 = vector.multi_reduction <add>, %28, %cst_12 [1] : vector<8x16x32xf32> to vector<8x32xf32>
    %c0_13 = arith.constant 0 : index
    %c0_14 = arith.constant 0 : index
    %30 = vector.load %arg5[%c0_13, %c0_14] : memref<8x32xf32, #tpu.memory_space<vmem>>, vector<8x32xf32>
    tpu.vector_store %arg5[%c0_13, %c0_14], %29 {strides = array<i32>} : memref<8x32xf32, #tpu.memory_space<vmem>>, vector<8x32xf32>,
    %c0_15 = arith.constant 0 : index
    %c0_16 = arith.constant 0 : index
    %31 = vector.load %arg6[%c0_15, %c0_16] : memref<8x16xf32, #tpu.memory_space<vmem>>, vector<8x16xf32>
    tpu.vector_store %arg6[%c0_15, %c0_16], %25 {strides = array<i32>} : memref<8x16xf32, #tpu.memory_space<vmem>>, vector<8x16xf32>,
    return
  }
  func.func @transform_0(%arg0: i32) -> (i32, i32, i32) {
    %c0_i32 = arith.constant 0 : i32
    %c0_i32_0 = arith.constant 0 : i32
    %c0_i32_1 = arith.constant 0 : i32
    return %arg0, %c0_i32, %c0_i32_0 : i32, i32, i32
  }
  func.func @transform_1(%arg0: i32) -> (i32, i32) {
    %c0_i32 = arith.constant 0 : i32
    %c0_i32_0 = arith.constant 0 : i32
    return %arg0, %c0_i32 : i32, i32
  }
  func.func @transform_2(%arg0: i32) -> (i32, i32) {
    %c0_i32 = arith.constant 0 : i32
    %c0_i32_0 = arith.constant 0 : i32
    %c0_i32_1 = arith.constant 0 : i32
    return %c0_i32, %c0_i32_0 : i32, i32
  }
  func.func @transform_3(%arg0: i32) -> (i32, i32) {
    %c0_i32 = arith.constant 0 : i32
    %c0_i32_0 = arith.constant 0 : i32
    %c0_i32_1 = arith.constant 0 : i32
    return %c0_i32, %c0_i32_0 : i32, i32
  }
  func.func @transform_4(%arg0: i32) -> (i32, i32) {
    %c0_i32 = arith.constant 0 : i32
    %c0_i32_0 = arith.constant 0 : i32
    return %arg0, %c0_i32 : i32, i32
  }
  func.func @transform_5(%arg0: i32) -> (i32, i32) {
    %c0_i32 = arith.constant 0 : i32
    %c0_i32_0 = arith.constant 0 : i32
    return %arg0, %c0_i32 : i32, i32
  }
}

</mosaic_0001>

<llo_original>
// kernel: tpu_custom_call.1
$region0: #{tpu_custom_call.1}
  #allocation0 [shape = 'u32[]', space=smem, size = 0x4, offset = 0x4, fixed_abs, tag = 'smem constant byte address 0x4 - core index']
  #allocation1 [shape = 'u32[144,128]{1,0:T(1,128)}', space=vmem, size = 0x12000, scoped, tag = 'internal scratch']
  %s0 = inlined_call_operand.hbm [shape: f32[8,16,32], index: 0, kind: input, shape index: {}]
  %s1 = inlined_call_operand.hbm [shape: f32[8,48], index: 1, kind: input, shape index: {}]
  %s2 = inlined_call_operand.hbm [shape: f32[32,48], index: 2, kind: input, shape index: {}]
  %s3 = inlined_call_operand.vmem [shape: f32[1,48], index: 3, kind: input, shape index: {}]
  %s4 = inlined_call_operand.hbm [shape: f32[8,32], index: 4, kind: output, shape index: {0}]
  %s5 = inlined_call_operand.hbm [shape: f32[8,16], index: 5, kind: output, shape index: {1}]
  %6 = xla_tuple %s4, %s5
  %s7 = sld [smem:[#allocation0]]
  $region46: #{tpu_custom_call.1} parent=0
    _
  %s9 = ssub.s32 1, %s7
  %s10 = scalar_select 0, %s9, %s7
  $region1: #{tpu_custom_call.1} parent=0
    #allocation2 [shape = 'u8[65536]{0}', space=vmem, size = 0x10000, scoped, tag = 'input window, operand 0, single buffered']
    #allocation3 [shape = 's32[1]{0}', space=sflag, size = 0x4, scoped, tag = 'scoped memory for tpu_custom_call.1']
    #allocation4 [shape = 's32[1]{0}', space=sflag, size = 0x4, scoped, tag = 'scoped memory for tpu_custom_call.1']
    #allocation5 [shape = 'u8[4096]{0}', space=vmem, size = 0x1000, scoped, tag = 'input window, operand 1, single buffered']
    #allocation6 [shape = 's32[1]{0}', space=sflag, size = 0x4, scoped, tag = 'scoped memory for tpu_custom_call.1']
    #allocation7 [shape = 'u8[16384]{0}', space=vmem, size = 0x4000, scoped, tag = 'input window, operand 2, single buffered']
    #allocation8 [shape = 'u8[4096]{0}', space=vmem, size = 0x1000, scoped, tag = 'output window, operand 0, single buffered']
    #allocation9 [shape = 'u8[4096]{0}', space=vmem, size = 0x1000, scoped, tag = 'output window, operand 1, single buffered']
    #allocation10 [shape = 's32[1]{0}', space=sflag, size = 0x4, scoped, tag = 'scoped memory for tpu_custom_call.1']
    %11 = vsyncpa [#allocation3], 0
    %12 = vsyncpa [#allocation6], 0
    %13 = vsyncpa [#allocation4], 0
    %14 = vsyncpa [#allocation10], 0
    // Predicated region
    $region2: #{tpu_custom_call.1} parent=1 // pred_check
      _
    $region3: #{tpu_custom_call.1} parent=1 // pred_check_branch
      %16 = sbr.rel (0) target = $region5
    $region4: #{tpu_custom_call.1} parent=1 // pred_region
      %s18 = ssub.s32 2048, 2048
      %19 = vsyncadd [#allocation3], %s18
      %s20 = sshll.u32 [#allocation2], 4
      %s21 = int_to_ptr.vmem [resolvable:$true] %s20
      %26 = dma.hbm_to_vmem [thread:$0]  %s0, 2048, %s21, [#allocation3], 128, 128, 8
    $region5: #{tpu_custom_call.1} parent=1 // pred_fallthru
      _
    // Predicated region
    $region6: #{tpu_custom_call.1} parent=1 // pred_check
      _
    $region7: #{tpu_custom_call.1} parent=1 // pred_check_branch
      %28 = sbr.rel (0) target = $region9
    $region8: #{tpu_custom_call.1} parent=1 // pred_region
      %s30 = ssub.s32 128, 128
      %31 = vsyncadd [#allocation6], %s30
      %s33 = sshll.u32 [#allocation5], 4
      %s34 = int_to_ptr.vmem [resolvable:$true] %s33
      %36 = dma.hbm_to_vmem [thread:$0]  %s1, 128, %s34, [#allocation6]
    $region9: #{tpu_custom_call.1} parent=1 // pred_fallthru
      _
    // Predicated region
    $region10: #{tpu_custom_call.1} parent=1 // pred_check
      _
    $region11: #{tpu_custom_call.1} parent=1 // pred_check_branch
      %38 = sbr.rel (0) target = $region13
    $region12: #{tpu_custom_call.1} parent=1 // pred_region
      %s40 = ssub.s32 512, 512
      %41 = vsyncadd [#allocation6], %s40
      %s42 = sshll.u32 [#allocation7], 4
      %s43 = int_to_ptr.vmem [resolvable:$true] %s42
      %48 = dma.hbm_to_vmem [thread:$0]  %s2, 512, %s43, [#allocation6], 128, 128, 8
    $region13: #{tpu_custom_call.1} parent=1 // pred_fallthru
      _
    // Predicated region
    $region14: #{tpu_custom_call.1} parent=1 // pred_check
      _
    $region15: #{tpu_custom_call.1} parent=1 // pred_check_branch
      %50 = sbr.rel (0) target = $region17
    $region16: #{tpu_custom_call.1} parent=1 // pred_region
      _
    $region17: #{tpu_custom_call.1} parent=1 // pred_fallthru
      _
    // Predicated region
    $region18: #{tpu_custom_call.1} parent=1 // pred_check
      _
    $region19: #{tpu_custom_call.1} parent=1 // pred_check_branch
      %52 = sbr.rel (0) target = $region21
    $region20: #{tpu_custom_call.1} parent=1 // pred_region
      %53 = dma.done [#allocation3], 2048
    $region21: #{tpu_custom_call.1} parent=1 // pred_fallthru
      _
    // Predicated region
    $region22: #{tpu_custom_call.1} parent=1 // pred_check
      _
    $region23: #{tpu_custom_call.1} parent=1 // pred_check_branch
      %55 = sbr.rel (0) target = $region25
    $region24: #{tpu_custom_call.1} parent=1 // pred_region
      %56 = dma.done [#allocation6], 128
    $region25: #{tpu_custom_call.1} parent=1 // pred_fallthru
      _
    // Predicated region
    $region26: #{tpu_custom_call.1} parent=1 // pred_check
      _
    $region27: #{tpu_custom_call.1} parent=1 // pred_check_branch
      %58 = sbr.rel (0) target = $region29
    $region28: #{tpu_custom_call.1} parent=1 // pred_region
      %59 = dma.done [#allocation6], 512
    $region29: #{tpu_custom_call.1} parent=1 // pred_fallthru
      _
    %v60 = vld [vmem:[#allocation2] sm:$0xff]
    %v61 = vld [vmem:[#allocation2 + $0x8] sm:$0xff]
    %v62 = vld [vmem:[#allocation2 + $0x10] sm:$0xff]
    %v63 = vld [vmem:[#allocation2 + $0x18] sm:$0xff]
    %v64 = vld [vmem:[#allocation2 + $0x20] sm:$0xff]
    %v65 = vld [vmem:[#allocation2 + $0x28] sm:$0xff]
    %v66 = vld [vmem:[#allocation2 + $0x30] sm:$0xff]
    %v67 = vld [vmem:[#allocation2 + $0x38] sm:$0xff]
    %v68 = vld [vmem:[#allocation2 + $0x40] sm:$0xff]
    %v69 = vld [vmem:[#allocation2 + $0x48] sm:$0xff]
    %v70 = vld [vmem:[#allocation2 + $0x50] sm:$0xff]
    %v71 = vld [vmem:[#allocation2 + $0x58] sm:$0xff]
    %v72 = vld [vmem:[#allocation2 + $0x60] sm:$0xff]
    %v73 = vld [vmem:[#allocation2 + $0x68] sm:$0xff]
    %v74 = vld [vmem:[#allocation2 + $0x70] sm:$0xff]
    %v75 = vld [vmem:[#allocation2 + $0x78] sm:$0xff]
    %v76 = vld [vmem:[#allocation7] sm:$0xff]
    %v77 = vld [vmem:[#allocation7 + $0x8] sm:$0xff]
    %v78 = vld [vmem:[#allocation7 + $0x10] sm:$0xff]
    %v79 = vld [vmem:[#allocation7 + $0x18] sm:$0xff]
    %vm80 = vcmask 261120
    %v82 = vsel %vm80, %v60, 0
    %v85 = vsel %vm80, %v61, 0
    %v88 = vsel %vm80, %v62, 0
    %v91 = vsel %vm80, %v63, 0
    %v94 = vsel %vm80, %v64, 0
    %v97 = vsel %vm80, %v65, 0
    %v100 = vsel %vm80, %v66, 0
    %v103 = vsel %vm80, %v67, 0
    %v106 = vsel %vm80, %v68, 0
    %v109 = vsel %vm80, %v69, 0
    %v112 = vsel %vm80, %v70, 0
    %v115 = vsel %vm80, %v71, 0
    %v118 = vsel %vm80, %v72, 0
    %v121 = vsel %vm80, %v73, 0
    %v124 = vsel %vm80, %v74, 0
    %v127 = vsel %vm80, %v75, 0
    %129 = vmatprep.subr.mxu0 0.0
    %130 = vmatpush1.msra.mxu0 %v76
    %131 = vmatprep.subr.mxu0 0.0
    %132 = vmatpush1.msra.mxu0 %v77
    %133 = vmatprep.subr.mxu0 0.0
    %134 = vmatpush1.msra.mxu0 %v78
    %135 = vmatprep.subr.mxu0 0.0
    %136 = vmatpush1.msra.mxu0 %v79
    %137 = vmatprep.subr.mxu0 0.0
    %138 = vmatpush1.msra.mxu0 0.0
    %139 = vmatprep.subr.mxu0 0.0
    %140 = vmatpush1.msra.mxu0 0.0
    %141 = vmatprep.subr.mxu0 0.0
    %142 = vmatpush1.msra.mxu0 0.0
    %143 = vmatprep.subr.mxu0 0.0
    %144 = vmatpush1.msra.mxu0 0.0
    %145 = vmatprep.subr.mxu0 0.0
    %146 = vmatpush1.msra.mxu0 0.0
    %147 = vmatprep.subr.mxu0 0.0
    %148 = vmatpush1.msra.mxu0 0.0
    %149 = vmatprep.subr.mxu0 0.0
    %150 = vmatpush1.msra.mxu0 0.0
    %151 = vmatprep.subr.mxu0 0.0
    %152 = vmatpush1.msra.mxu0 0.0
    %153 = vmatprep.subr.mxu0 0.0
    %154 = vmatpush1.msra.mxu0 0.0
    %155 = vmatprep.subr.mxu0 0.0
    %156 = vmatpush1.msra.mxu0 0.0
    %157 = vmatprep.subr.mxu0 0.0
    %158 = vmatpush1.msra.mxu0 0.0
    %159 = vmatprep.subr.mxu0 0.0
    %160 = vmatpush1.msra.mxu0 0.0
    %161 = vmatprep.subr.mxu0 0.0
    %162 = vmatpush1.msra.mxu0 0.0
    %163 = vmatprep.subr.mxu0 0.0
    %164 = vmatpush1.msra.mxu0 0.0
    %165 = vmatprep.subr.mxu0 0.0
    %166 = vmatpush1.msra.mxu0 0.0
    %167 = vmatprep.subr.mxu0 0.0
    %168 = vmatpush1.msra.mxu0 0.0
    %169 = vmatprep.subr.mxu0 0.0
    %170 = vmatpush1.msra.mxu0 0.0
    %171 = vmatprep.subr.mxu0 0.0
    %172 = vmatpush1.msra.mxu0 0.0
    %173 = vmatprep.subr.mxu0 0.0
    %174 = vmatpush1.msra.mxu0 0.0
    %175 = vmatprep.subr.mxu0 0.0
    %176 = vmatpush1.msra.mxu0 0.0
    %177 = vmatprep.subr.mxu0 0.0
    %178 = vmatpush1.msra.mxu0 0.0
    %179 = vmatprep.subr.mxu0 0.0
    %180 = vmatpush1.msra.mxu0 0.0
    %181 = vmatprep.subr.mxu0 0.0
    %182 = vmatpush1.msra.mxu0 0.0
    %183 = vmatprep.subr.mxu0 0.0
    %184 = vmatpush1.msra.mxu0 0.0
    %185 = vmatprep.subr.mxu0 0.0
    %186 = vmatpush1.msra.mxu0 0.0
    %187 = vmatprep.subr.mxu0 0.0
    %188 = vmatpush1.msra.mxu0 0.0
    %189 = vmatprep.subr.mxu0 0.0
    %190 = vmatpush1.msra.mxu0 0.0
    %191 = vmatprep.subr.mxu0 0.0
    %192 = vmatpush1.msra.mxu0 0.0
    %193 = vmatprep.mubr.f32.mxu0 0.0
    %194 = vmatmul.mubr.f32.gmra.mrb[0].mxu0 %v82
    %v195 = vpop.f32.mrb[0].mxu0
    %v196 = vadd.f32 0.0, %v195
    %v197 = vpop.f32.mrb[0].mxu0
    %198 = vmatprep.mubr.f32.mxu0 0.0
    %199 = vmatmul.mubr.f32.gmra.mrb[0].mxu0 %v85
    %v200 = vpop.f32.mrb[0].mxu0
    %v201 = vadd.f32 0.0, %v200
    %v202 = vpop.f32.mrb[0].mxu0
    %203 = vmatprep.mubr.f32.mxu0 0.0
    %204 = vmatmul.mubr.f32.gmra.mrb[0].mxu0 %v88
    %v205 = vpop.f32.mrb[0].mxu0
    %v206 = vadd.f32 0.0, %v205
    %v207 = vpop.f32.mrb[0].mxu0
    %208 = vmatprep.mubr.f32.mxu0 0.0
    %209 = vmatmul.mubr.f32.gmra.mrb[0].mxu0 %v91
    %v210 = vpop.f32.mrb[0].mxu0
    %v211 = vadd.f32 0.0, %v210
    %v212 = vpop.f32.mrb[0].mxu0
    %213 = vmatprep.mubr.f32.mxu0 0.0
    %214 = vmatmul.mubr.f32.gmra.mrb[0].mxu0 %v94
    %v215 = vpop.f32.mrb[0].mxu0
    %v216 = vadd.f32 0.0, %v215
    %v217 = vpop.f32.mrb[0].mxu0
    %218 = vmatprep.mubr.f32.mxu0 0.0
    %219 = vmatmul.mubr.f32.gmra.mrb[0].mxu0 %v97
    %v220 = vpop.f32.mrb[0].mxu0
    %v221 = vadd.f32 0.0, %v220
    %v222 = vpop.f32.mrb[0].mxu0
    %223 = vmatprep.mubr.f32.mxu0 0.0
    %224 = vmatmul.mubr.f32.gmra.mrb[0].mxu0 %v100
    %v225 = vpop.f32.mrb[0].mxu0
    %v226 = vadd.f32 0.0, %v225
    %v227 = vpop.f32.mrb[0].mxu0
    %228 = vmatprep.mubr.f32.mxu0 0.0
    %229 = vmatmul.mubr.f32.gmra.mrb[0].mxu0 %v103
    %v230 = vpop.f32.mrb[0].mxu0
    %v231 = vadd.f32 0.0, %v230
    %v232 = vpop.f32.mrb[0].mxu0
    %233 = vmatprep.mubr.f32.mxu0 0.0
    %234 = vmatmul.mubr.f32.gmra.mrb[0].mxu0 %v106
    %v235 = vpop.f32.mrb[0].mxu0
    %v236 = vadd.f32 0.0, %v235
    %v237 = vpop.f32.mrb[0].mxu0
    %238 = vmatprep.mubr.f32.mxu0 0.0
    %239 = vmatmul.mubr.f32.gmra.mrb[0].mxu0 %v109
    %v240 = vpop.f32.mrb[0].mxu0
    %v241 = vadd.f32 0.0, %v240
    %v242 = vpop.f32.mrb[0].mxu0
    %243 = vmatprep.mubr.f32.mxu0 0.0
    %244 = vmatmul.mubr.f32.gmra.mrb[0].mxu0 %v112
    %v245 = vpop.f32.mrb[0].mxu0
    %v246 = vadd.f32 0.0, %v245
    %v247 = vpop.f32.mrb[0].mxu0
    %248 = vmatprep.mubr.f32.mxu0 0.0
    %249 = vmatmul.mubr.f32.gmra.mrb[0].mxu0 %v115
    %v250 = vpop.f32.mrb[0].mxu0
    %v251 = vadd.f32 0.0, %v250
    %v252 = vpop.f32.mrb[0].mxu0
    %253 = vmatprep.mubr.f32.mxu0 0.0
    %254 = vmatmul.mubr.f32.gmra.mrb[0].mxu0 %v118
    %v255 = vpop.f32.mrb[0].mxu0
    %v256 = vadd.f32 0.0, %v255
    %v257 = vpop.f32.mrb[0].mxu0
    %258 = vmatprep.mubr.f32.mxu0 0.0
    %259 = vmatmul.mubr.f32.gmra.mrb[0].mxu0 %v121
    %v260 = vpop.f32.mrb[0].mxu0
    %v261 = vadd.f32 0.0, %v260
    %v262 = vpop.f32.mrb[0].mxu0
    %263 = vmatprep.mubr.f32.mxu0 0.0
    %264 = vmatmul.mubr.f32.gmra.mrb[0].mxu0 %v124
    %v265 = vpop.f32.mrb[0].mxu0
    %v266 = vadd.f32 0.0, %v265
    %v267 = vpop.f32.mrb[0].mxu0
    %268 = vmatprep.mubr.f32.mxu0 0.0
    %269 = vmatmul.mubr.f32.gmra.mrb[0].mxu0 %v127
    %v270 = vpop.f32.mrb[0].mxu0
    %v271 = vadd.f32 0.0, %v270
    %v272 = vpop.f32.mrb[0].mxu0
    %273 = vdwg.mxu0
    %v274 = vld [vmem:[#allocation5] sm:$0xff]
    %v276 = vcombine.high %v274, %v274
    %v278 = vunpack.c.l.s4 1966171168
    %v279 = vunpack.c.0.s8 %v278
    %v280 = vlaneseq
    %v281 = vshrl.u32 %v280, 7
    %v282 = vsub.s32 %v279, %v281
    %v283 = vrot.slane %v274, %v282
    %v285 = vunpack.c.l.s4 1966171168
    %v286 = vunpack.c.0.s8 %v285
    %v287 = vlaneseq
    %v288 = vshrl.u32 %v287, 7
    %v289 = vsub.s32 %v286, %v288
    %v290 = vrot.slane %v276, %v289
    %v291 = vcombine.high %v283, %v283
    %v292 = vcombine.high %v290, %v290
    %v294 = vunpack.c.l.s4 1966171168
    %v295 = vunpack.c.0.s8 %v294
    %v296 = vlaneseq
    %v297 = vshrl.u32 %v296, 7
    %v298 = vsub.s32 %v295, %v297
    %v299 = vrot.slane %v283, %v298
    %v301 = vunpack.c.l.s4 1966171168
    %v302 = vunpack.c.0.s8 %v301
    %v303 = vlaneseq
    %v304 = vshrl.u32 %v303, 7
    %v305 = vsub.s32 %v302, %v304
    %v306 = vrot.slane %v290, %v305
    %v308 = vunpack.c.l.s4 1966171168
    %v309 = vunpack.c.0.s8 %v308
    %v310 = vlaneseq
    %v311 = vshrl.u32 %v310, 7
    %v312 = vsub.s32 %v309, %v311
    %v313 = vrot.slane %v291, %v312
    %v315 = vunpack.c.l.s4 1966171168
    %v316 = vunpack.c.0.s8 %v315
    %v317 = vlaneseq
    %v318 = vshrl.u32 %v317, 7
    %v319 = vsub.s32 %v316, %v318
    %v320 = vrot.slane %v292, %v319
    %v321 = vcombine.high %v299, %v299
    %v322 = vcombine.high %v306, %v306
    %v323 = vcombine.high %v313, %v313
    %v324 = vcombine.high %v320, %v320
    %v325 = vlaneseq
    %v326 = vshrl.u32 %v325, 7
    %v327 = vsub.s32 0, %v326
    %v328 = vrot.slane %v299, %v327
    %v329 = vlaneseq
    %v330 = vshrl.u32 %v329, 7
    %v331 = vsub.s32 0, %v330
    %v332 = vrot.slane %v313, %v331
    %v333 = vlaneseq
    %v334 = vshrl.u32 %v333, 7
    %v335 = vsub.s32 0, %v334
    %v336 = vrot.slane %v321, %v335
    %v337 = vlaneseq
    %v338 = vshrl.u32 %v337, 7
    %v339 = vsub.s32 0, %v338
    %v340 = vrot.slane %v323, %v339
    %v341 = vlaneseq
    %v342 = vshrl.u32 %v341, 7
    %v343 = vsub.s32 0, %v342
    %v344 = vrot.slane %v306, %v343
    %v345 = vlaneseq
    %v346 = vshrl.u32 %v345, 7
    %v347 = vsub.s32 0, %v346
    %v348 = vrot.slane %v320, %v347
    %v349 = vlaneseq
    %v350 = vshrl.u32 %v349, 7
    %v351 = vsub.s32 0, %v350
    %v352 = vrot.slane %v322, %v351
    %v353 = vlaneseq
    %v354 = vshrl.u32 %v353, 7
    %v355 = vsub.s32 0, %v354
    %v356 = vrot.slane %v324, %v355
    %v365 = vadd.f32 %v196, %v328
    %v366 = vadd.f32 %v201, %v328
    %v367 = vadd.f32 %v206, %v332
    %v368 = vadd.f32 %v211, %v332
    %v369 = vadd.f32 %v216, %v336
    %v370 = vadd.f32 %v221, %v336
    %v371 = vadd.f32 %v226, %v340
    %v372 = vadd.f32 %v231, %v340
    %v373 = vadd.f32 %v236, %v344
    %v374 = vadd.f32 %v241, %v344
    %v375 = vadd.f32 %v246, %v348
    %v376 = vadd.f32 %v251, %v348
    %v377 = vadd.f32 %v256, %v352
    %v378 = vadd.f32 %v261, %v352
    %v379 = vadd.f32 %v266, %v356
    %v380 = vadd.f32 %v271, %v356
    %v381 = vmax.f32 %v365, 0.0
    %v382 = vmax.f32 %v366, 0.0
    %v383 = vmax.f32 %v367, 0.0
    %v384 = vmax.f32 %v368, 0.0
    %v385 = vmax.f32 %v369, 0.0
    %v386 = vmax.f32 %v370, 0.0
    %v387 = vmax.f32 %v371, 0.0
    %v388 = vmax.f32 %v372, 0.0
    %v389 = vmax.f32 %v373, 0.0
    %v390 = vmax.f32 %v374, 0.0
    %v391 = vmax.f32 %v375, 0.0
    %v392 = vmax.f32 %v376, 0.0
    %v393 = vmax.f32 %v377, 0.0
    %v394 = vmax.f32 %v378, 0.0
    %v395 = vmax.f32 %v379, 0.0
    %v396 = vmax.f32 %v380, 0.0
    %v397 = vld [vmem:[%s3] sm:$0x1]
    %v399 = vlaneseq
    %v400 = vshrl.u32 %v399, 7
    %v401 = vsub.s32 0, %v400
    %v402 = vrot.slane %v397, %v401
    %v404 = vmul.f32 %v381, %v402
    %v405 = vmul.f32 %v382, %v402
    %v406 = vmul.f32 %v383, %v402
    %v407 = vmul.f32 %v384, %v402
    %v408 = vmul.f32 %v385, %v402
    %v409 = vmul.f32 %v386, %v402
    %v410 = vmul.f32 %v387, %v402
    %v411 = vmul.f32 %v388, %v402
    %v412 = vmul.f32 %v389, %v402
    %v413 = vmul.f32 %v390, %v402
    %v414 = vmul.f32 %v391, %v402
    %v415 = vmul.f32 %v392, %v402
    %v416 = vmul.f32 %v393, %v402
    %v417 = vmul.f32 %v394, %v402
    %v418 = vmul.f32 %v395, %v402
    %v419 = vmul.f32 %v396, %v402
    %vm420 = vcmask 392192
    %v421 = vsel %vm420, %v404, 0.0
    %422 = vadd.xlane.f32.xlu0 %v421
    %v423 = vpop.xlane.xlu0 %422
    %v424 = vsel %vm420, %v405, 0.0
    %425 = vadd.xlane.f32.xlu0 %v424
    %v426 = vpop.xlane.xlu0 %425
    %v427 = vsel %vm420, %v406, 0.0
    %428 = vadd.xlane.f32.xlu0 %v427
    %v429 = vpop.xlane.xlu0 %428
    %v430 = vsel %vm420, %v407, 0.0
    %431 = vadd.xlane.f32.xlu0 %v430
    %v432 = vpop.xlane.xlu0 %431
    %v433 = vsel %vm420, %v408, 0.0
    %434 = vadd.xlane.f32.xlu0 %v433
    %v435 = vpop.xlane.xlu0 %434
    %v436 = vsel %vm420, %v409, 0.0
    %437 = vadd.xlane.f32.xlu0 %v436
    %v438 = vpop.xlane.xlu0 %437
    %v439 = vsel %vm420, %v410, 0.0
    %440 = vadd.xlane.f32.xlu0 %v439
    %v441 = vpop.xlane.xlu0 %440
    %v442 = vsel %vm420, %v411, 0.0
    %443 = vadd.xlane.f32.xlu0 %v442
    %v444 = vpop.xlane.xlu0 %443
    %v445 = vsel %vm420, %v412, 0.0
    %446 = vadd.xlane.f32.xlu0 %v445
    %v447 = vpop.xlane.xlu0 %446
    %v448 = vsel %vm420, %v413, 0.0
    %449 = vadd.xlane.f32.xlu0 %v448
    %v450 = vpop.xlane.xlu0 %449
    %v451 = vsel %vm420, %v414, 0.0
    %452 = vadd.xlane.f32.xlu0 %v451
    %v453 = vpop.xlane.xlu0 %452
    %v454 = vsel %vm420, %v415, 0.0
    %455 = vadd.xlane.f32.xlu0 %v454
    %v456 = vpop.xlane.xlu0 %455
    %v457 = vsel %vm420, %v416, 0.0
    %458 = vadd.xlane.f32.xlu0 %v457
    %v459 = vpop.xlane.xlu0 %458
    %v460 = vsel %vm420, %v417, 0.0
    %461 = vadd.xlane.f32.xlu0 %v460
    %v462 = vpop.xlane.xlu0 %461
    %v463 = vsel %vm420, %v418, 0.0
    %464 = vadd.xlane.f32.xlu0 %v463
    %v465 = vpop.xlane.xlu0 %464
    %v466 = vsel %vm420, %v419, 0.0
    %467 = vadd.xlane.f32.xlu0 %v466
    %v468 = vpop.xlane.xlu0 %467
    %v485 = vlaneseq
    %v486 = vand.u32 %v485, 127
    %v487 = vlaneseq
    %v488 = vshrl.u32 %v487, 7
    %v489 = vsub.s32 %v486, %v488
    %v490 = vrot.slane %v423, %v489
    %v491 = vadd.s32 %v486, 4294967288
    %v492 = vlaneseq
    %v493 = vshrl.u32 %v492, 7
    %v494 = vsub.s32 %v491, %v493
    %v495 = vrot.slane %v426, %v494
    %vm496 = vcmask 130112
    %v497 = vsel %vm496, %v495, %v490
    %v498 = vlaneseq
    %v499 = vshrl.u32 %v498, 7
    %v500 = vsub.s32 %v486, %v499
    %v501 = vrot.slane %v429, %v500
    %v502 = vlaneseq
    %v503 = vshrl.u32 %v502, 7
    %v504 = vsub.s32 %v491, %v503
    %v505 = vrot.slane %v432, %v504
    %v506 = vsel %vm496, %v505, %v501
    %v507 = vlaneseq
    %v508 = vshrl.u32 %v507, 7
    %v509 = vsub.s32 %v486, %v508
    %v510 = vrot.slane %v435, %v509
    %v511 = vlaneseq
    %v512 = vshrl.u32 %v511, 7
    %v513 = vsub.s32 %v491, %v512
    %v514 = vrot.slane %v438, %v513
    %v515 = vsel %vm496, %v514, %v510
    %v516 = vlaneseq
    %v517 = vshrl.u32 %v516, 7
    %v518 = vsub.s32 %v486, %v517
    %v519 = vrot.slane %v441, %v518
    %v520 = vlaneseq
    %v521 = vshrl.u32 %v520, 7
    %v522 = vsub.s32 %v491, %v521
    %v523 = vrot.slane %v444, %v522
    %v524 = vsel %vm496, %v523, %v519
    %v525 = vlaneseq
    %v526 = vshrl.u32 %v525, 7
    %v527 = vsub.s32 %v486, %v526
    %v528 = vrot.slane %v447, %v527
    %v529 = vlaneseq
    %v530 = vshrl.u32 %v529, 7
    %v531 = vsub.s32 %v491, %v530
    %v532 = vrot.slane %v450, %v531
    %v533 = vsel %vm496, %v532, %v528
    %v534 = vlaneseq
    %v535 = vshrl.u32 %v534, 7
    %v536 = vsub.s32 %v486, %v535
    %v537 = vrot.slane %v453, %v536
    %v538 = vlaneseq
    %v539 = vshrl.u32 %v538, 7
    %v540 = vsub.s32 %v491, %v539
    %v541 = vrot.slane %v456, %v540
    %v542 = vsel %vm496, %v541, %v537
    %v543 = vlaneseq
    %v544 = vshrl.u32 %v543, 7
    %v545 = vsub.s32 %v486, %v544
    %v546 = vrot.slane %v459, %v545
    %v547 = vlaneseq
    %v548 = vshrl.u32 %v547, 7
    %v549 = vsub.s32 %v491, %v548
    %v550 = vrot.slane %v462, %v549
    %v551 = vsel %vm496, %v550, %v546
    %v552 = vlaneseq
    %v553 = vshrl.u32 %v552, 7
    %v554 = vsub.s32 %v486, %v553
    %v555 = vrot.slane %v465, %v554
    %v556 = vlaneseq
    %v557 = vshrl.u32 %v556, 7
    %v558 = vsub.s32 %v491, %v557
    %v559 = vrot.slane %v468, %v558
    %v560 = vsel %vm496, %v559, %v555
    %vm561 = vcmask 1041409
    %v562 = vsel %vm561, %v506, %v497
    %vm563 = vcmask 1042434
    %v564 = vsel %vm563, %v515, %v562
    %vm565 = vcmask 1043459
    %v566 = vsel %vm565, %v524, %v564
    %vm567 = vcmask 1044484
    %v568 = vsel %vm567, %v533, %v566
    %vm569 = vcmask 1045509
    %v570 = vsel %vm569, %v542, %v568
    %vm571 = vcmask 1046534
    %v572 = vsel %vm571, %v551, %v570
    %vm573 = vcmask 1047559
    %v574 = vsel %vm573, %v560, %v572
    %vm576 = vcmask 130048
    %v577 = vsel %vm576, %v574, -inf
    %578 = vmax.xlane.f32.xlu0 %v577
    %v579 = vpop.xlane.xlu0 %578
    %v581 = vlaneseq
    %v582 = vshrl.u32 %v581, 7
    %v583 = vsub.s32 0, %v582
    %v584 = vrot.slane %v579, %v583
    %v585 = vlaneseq
    %v586 = vshrl.u32 %v585, 7
    %v587 = vsub.s32 1, %v586
    %v588 = vrot.slane %v579, %v587
    %v589 = vlaneseq
    %v590 = vshrl.u32 %v589, 7
    %v591 = vsub.s32 2, %v590
    %v592 = vrot.slane %v579, %v591
    %v593 = vlaneseq
    %v594 = vshrl.u32 %v593, 7
    %v595 = vsub.s32 3, %v594
    %v596 = vrot.slane %v579, %v595
    %v597 = vlaneseq
    %v598 = vshrl.u32 %v597, 7
    %v599 = vsub.s32 4, %v598
    %v600 = vrot.slane %v579, %v599
    %v601 = vlaneseq
    %v602 = vshrl.u32 %v601, 7
    %v603 = vsub.s32 5, %v602
    %v604 = vrot.slane %v579, %v603
    %v605 = vlaneseq
    %v606 = vshrl.u32 %v605, 7
    %v607 = vsub.s32 6, %v606
    %v608 = vrot.slane %v579, %v607
    %v609 = vlaneseq
    %v610 = vshrl.u32 %v609, 7
    %v611 = vsub.s32 7, %v610
    %v612 = vrot.slane %v579, %v611
    %v621 = vsub.f32 %v423, %v584
    %v622 = vsub.f32 %v426, %v584
    %v623 = vsub.f32 %v429, %v588
    %v624 = vsub.f32 %v432, %v588
    %v625 = vsub.f32 %v435, %v592
    %v626 = vsub.f32 %v438, %v592
    %v627 = vsub.f32 %v441, %v596
    %v628 = vsub.f32 %v444, %v596
    %v629 = vsub.f32 %v447, %v600
    %v630 = vsub.f32 %v450, %v600
    %v631 = vsub.f32 %v453, %v604
    %v632 = vsub.f32 %v456, %v604
    %v633 = vsub.f32 %v459, %v608
    %v634 = vsub.f32 %v462, %v608
    %v635 = vsub.f32 %v465, %v612
    %v636 = vsub.f32 %v468, %v612
    %v637 = vmul.f32 %v621, 1.442695
    %v638 = vpow.pop %v637
    %v639 = vmul.f32 %v622, 1.442695
    %v640 = vpow.pop %v639
    %v641 = vmul.f32 %v623, 1.442695
    %v642 = vpow.pop %v641
    %v643 = vmul.f32 %v624, 1.442695
    %v644 = vpow.pop %v643
    %v645 = vmul.f32 %v625, 1.442695
    %v646 = vpow.pop %v645
    %v647 = vmul.f32 %v626, 1.442695
    %v648 = vpow.pop %v647
    %v649 = vmul.f32 %v627, 1.442695
    %v650 = vpow.pop %v649
    %v651 = vmul.f32 %v628, 1.442695
    %v652 = vpow.pop %v651
    %v653 = vmul.f32 %v629, 1.442695
    %v654 = vpow.pop %v653
    %v655 = vmul.f32 %v630, 1.442695
    %v656 = vpow.pop %v655
    %v657 = vmul.f32 %v631, 1.442695
    %v658 = vpow.pop %v657
    %v659 = vmul.f32 %v632, 1.442695
    %v660 = vpow.pop %v659
    %v661 = vmul.f32 %v633, 1.442695
    %v662 = vpow.pop %v661
    %v663 = vmul.f32 %v634, 1.442695
    %v664 = vpow.pop %v663
    %v665 = vmul.f32 %v635, 1.442695
    %v666 = vpow.pop %v665
    %v667 = vmul.f32 %v636, 1.442695
    %v668 = vpow.pop %v667
    %685 = vset.pattern.permute.xlu0 0
    %686 = vperm.xlu0 %685, %v638
    %v687 = vpop.permute.xlu0 %686
    %688 = vset.pattern.permute.xlu0 0
    %689 = vperm.xlu0 %688, %v640
    %v690 = vpop.permute.xlu0 %689
    %691 = vset.pattern.permute.xlu0 0
    %692 = vperm.xlu0 %691, %v642
    %v693 = vpop.permute.xlu0 %692
    %694 = vset.pattern.permute.xlu0 0
    %695 = vperm.xlu0 %694, %v644
    %v696 = vpop.permute.xlu0 %695
    %697 = vset.pattern.permute.xlu0 0
    %698 = vperm.xlu0 %697, %v646
    %v699 = vpop.permute.xlu0 %698
    %700 = vset.pattern.permute.xlu0 0
    %701 = vperm.xlu0 %700, %v648
    %v702 = vpop.permute.xlu0 %701
    %703 = vset.pattern.permute.xlu0 0
    %704 = vperm.xlu0 %703, %v650
    %v705 = vpop.permute.xlu0 %704
    %706 = vset.pattern.permute.xlu0 0
    %707 = vperm.xlu0 %706, %v652
    %v708 = vpop.permute.xlu0 %707
    %709 = vset.pattern.permute.xlu0 0
    %710 = vperm.xlu0 %709, %v654
    %v711 = vpop.permute.xlu0 %710
    %712 = vset.pattern.permute.xlu0 0
    %713 = vperm.xlu0 %712, %v656
    %v714 = vpop.permute.xlu0 %713
    %715 = vset.pattern.permute.xlu0 0
    %716 = vperm.xlu0 %715, %v658
    %v717 = vpop.permute.xlu0 %716
    %718 = vset.pattern.permute.xlu0 0
    %719 = vperm.xlu0 %718, %v660
    %v720 = vpop.permute.xlu0 %719
    %721 = vset.pattern.permute.xlu0 0
    %722 = vperm.xlu0 %721, %v662
    %v723 = vpop.permute.xlu0 %722
    %724 = vset.pattern.permute.xlu0 0
    %725 = vperm.xlu0 %724, %v664
    %v726 = vpop.permute.xlu0 %725
    %727 = vset.pattern.permute.xlu0 0
    %728 = vperm.xlu0 %727, %v666
    %v729 = vpop.permute.xlu0 %728
    %730 = vset.pattern.permute.xlu0 0
    %731 = vperm.xlu0 %730, %v668
    %v732 = vpop.permute.xlu0 %731
    %v733 = vlaneseq
    %v734 = vshrl.u32 %v733, 7
    %v735 = vsub.s32 %v486, %v734
    %v736 = vrot.slane %v687, %v735
    %v737 = vlaneseq
    %v738 = vshrl.u32 %v737, 7
    %v739 = vsub.s32 %v491, %v738
    %v740 = vrot.slane %v690, %v739
    %v741 = vsel %vm496, %v740, %v736
    %v742 = vlaneseq
    %v743 = vshrl.u32 %v742, 7
    %v744 = vsub.s32 %v486, %v743
    %v745 = vrot.slane %v693, %v744
    %v746 = vlaneseq
    %v747 = vshrl.u32 %v746, 7
    %v748 = vsub.s32 %v491, %v747
    %v749 = vrot.slane %v696, %v748
    %v750 = vsel %vm496, %v749, %v745
    %v751 = vlaneseq
    %v752 = vshrl.u32 %v751, 7
    %v753 = vsub.s32 %v486, %v752
    %v754 = vrot.slane %v699, %v753
    %v755 = vlaneseq
    %v756 = vshrl.u32 %v755, 7
    %v757 = vsub.s32 %v491, %v756
    %v758 = vrot.slane %v702, %v757
    %v759 = vsel %vm496, %v758, %v754
    %v760 = vlaneseq
    %v761 = vshrl.u32 %v760, 7
    %v762 = vsub.s32 %v486, %v761
    %v763 = vrot.slane %v705, %v762
    %v764 = vlaneseq
    %v765 = vshrl.u32 %v764, 7
    %v766 = vsub.s32 %v491, %v765
    %v767 = vrot.slane %v708, %v766
    %v768 = vsel %vm496, %v767, %v763
    %v769 = vlaneseq
    %v770 = vshrl.u32 %v769, 7
    %v771 = vsub.s32 %v486, %v770
    %v772 = vrot.slane %v711, %v771
    %v773 = vlaneseq
    %v774 = vshrl.u32 %v773, 7
    %v775 = vsub.s32 %v491, %v774
    %v776 = vrot.slane %v714, %v775
    %v777 = vsel %vm496, %v776, %v772
    %v778 = vlaneseq
    %v779 = vshrl.u32 %v778, 7
    %v780 = vsub.s32 %v486, %v779
    %v781 = vrot.slane %v717, %v780
    %v782 = vlaneseq
    %v783 = vshrl.u32 %v782, 7
    %v784 = vsub.s32 %v491, %v783
    %v785 = vrot.slane %v720, %v784
    %v786 = vsel %vm496, %v785, %v781
    %v787 = vlaneseq
    %v788 = vshrl.u32 %v787, 7
    %v789 = vsub.s32 %v486, %v788
    %v790 = vrot.slane %v723, %v789
    %v791 = vlaneseq
    %v792 = vshrl.u32 %v791, 7
    %v793 = vsub.s32 %v491, %v792
    %v794 = vrot.slane %v726, %v793
    %v795 = vsel %vm496, %v794, %v790
    %v796 = vlaneseq
    %v797 = vshrl.u32 %v796, 7
    %v798 = vsub.s32 %v486, %v797
    %v799 = vrot.slane %v729, %v798
    %v800 = vlaneseq
    %v801 = vshrl.u32 %v800, 7
    %v802 = vsub.s32 %v491, %v801
    %v803 = vrot.slane %v732, %v802
    %v804 = vsel %vm496, %v803, %v799
    %v805 = vsel %vm561, %v750, %v741
    %v806 = vsel %vm563, %v759, %v805
    %v807 = vsel %vm565, %v768, %v806
    %v808 = vsel %vm567, %v777, %v807
    %v809 = vsel %vm569, %v786, %v808
    %v810 = vsel %vm571, %v795, %v809
    %v811 = vsel %vm573, %v804, %v810
    %v813 = vsel %vm576, %v811, 0.0
    %814 = vadd.xlane.f32.xlu0 %v813
    %v815 = vpop.xlane.xlu0 %814
    %v816 = vrcp.pop %v815
    %v818 = vlaneseq
    %v819 = vshrl.u32 %v818, 7
    %v820 = vsub.s32 0, %v819
    %v821 = vrot.slane %v816, %v820
    %v822 = vlaneseq
    %v823 = vshrl.u32 %v822, 7
    %v824 = vsub.s32 1, %v823
    %v825 = vrot.slane %v816, %v824
    %v826 = vlaneseq
    %v827 = vshrl.u32 %v826, 7
    %v828 = vsub.s32 2, %v827
    %v829 = vrot.slane %v816, %v828
    %v830 = vlaneseq
    %v831 = vshrl.u32 %v830, 7
    %v832 = vsub.s32 3, %v831
    %v833 = vrot.slane %v816, %v832
    %v834 = vlaneseq
    %v835 = vshrl.u32 %v834, 7
    %v836 = vsub.s32 4, %v835
    %v837 = vrot.slane %v816, %v836
    %v838 = vlaneseq
    %v839 = vshrl.u32 %v838, 7
    %v840 = vsub.s32 5, %v839
    %v841 = vrot.slane %v816, %v840
    %v842 = vlaneseq
    %v843 = vshrl.u32 %v842, 7
    %v844 = vsub.s32 6, %v843
    %v845 = vrot.slane %v816, %v844
    %v846 = vlaneseq
    %v847 = vshrl.u32 %v846, 7
    %v848 = vsub.s32 7, %v847
    %v849 = vrot.slane %v816, %v848
    %v858 = vmul.f32 %v638, %v821
    %v859 = vmul.f32 %v640, %v821
    %v860 = vmul.f32 %v642, %v825
    %v861 = vmul.f32 %v644, %v825
    %v862 = vmul.f32 %v646, %v829
    %v863 = vmul.f32 %v648, %v829
    %v864 = vmul.f32 %v650, %v833
    %v865 = vmul.f32 %v652, %v833
    %v866 = vmul.f32 %v654, %v837
    %v867 = vmul.f32 %v656, %v837
    %v868 = vmul.f32 %v658, %v841
    %v869 = vmul.f32 %v660, %v841
    %v870 = vmul.f32 %v662, %v845
    %v871 = vmul.f32 %v664, %v845
    %v872 = vmul.f32 %v666, %v849
    %v873 = vmul.f32 %v668, %v849
    %875 = vset.pattern.permute.xlu0 0
    %876 = vperm.xlu0 %875, %v858
    %v877 = vpop.permute.xlu0 %876
    %880 = vset.pattern.permute.xlu0 0
    %881 = vperm.xlu0 %880, %v859
    %v882 = vpop.permute.xlu0 %881
    %885 = vset.pattern.permute.xlu0 0
    %886 = vperm.xlu0 %885, %v860
    %v887 = vpop.permute.xlu0 %886
    %890 = vset.pattern.permute.xlu0 0
    %891 = vperm.xlu0 %890, %v861
    %v892 = vpop.permute.xlu0 %891
    %895 = vset.pattern.permute.xlu0 0
    %896 = vperm.xlu0 %895, %v862
    %v897 = vpop.permute.xlu0 %896
    %900 = vset.pattern.permute.xlu0 0
    %901 = vperm.xlu0 %900, %v863
    %v902 = vpop.permute.xlu0 %901
    %905 = vset.pattern.permute.xlu0 0
    %906 = vperm.xlu0 %905, %v864
    %v907 = vpop.permute.xlu0 %906
    %910 = vset.pattern.permute.xlu0 0
    %911 = vperm.xlu0 %910, %v865
    %v912 = vpop.permute.xlu0 %911
    %915 = vset.pattern.permute.xlu0 0
    %916 = vperm.xlu0 %915, %v866
    %v917 = vpop.permute.xlu0 %916
    %920 = vset.pattern.permute.xlu0 0
    %921 = vperm.xlu0 %920, %v867
    %v922 = vpop.permute.xlu0 %921
    %925 = vset.pattern.permute.xlu0 0
    %926 = vperm.xlu0 %925, %v868
    %v927 = vpop.permute.xlu0 %926
    %930 = vset.pattern.permute.xlu0 0
    %931 = vperm.xlu0 %930, %v869
    %v932 = vpop.permute.xlu0 %931
    %935 = vset.pattern.permute.xlu0 0
    %936 = vperm.xlu0 %935, %v870
    %v937 = vpop.permute.xlu0 %936
    %940 = vset.pattern.permute.xlu0 0
    %941 = vperm.xlu0 %940, %v871
    %v942 = vpop.permute.xlu0 %941
    %945 = vset.pattern.permute.xlu0 0
    %946 = vperm.xlu0 %945, %v872
    %v947 = vpop.permute.xlu0 %946
    %950 = vset.pattern.permute.xlu0 0
    %951 = vperm.xlu0 %950, %v873
    %v952 = vpop.permute.xlu0 %951
    %v954 = vmul.f32 %v60, %v877
    %v955 = vmul.f32 %v61, %v882
    %v956 = vmul.f32 %v62, %v887
    %v957 = vmul.f32 %v63, %v892
    %v958 = vmul.f32 %v64, %v897
    %v959 = vmul.f32 %v65, %v902
    %v960 = vmul.f32 %v66, %v907
    %v961 = vmul.f32 %v67, %v912
    %v962 = vmul.f32 %v68, %v917
    %v963 = vmul.f32 %v69, %v922
    %v964 = vmul.f32 %v70, %v927
    %v965 = vmul.f32 %v71, %v932
    %v966 = vmul.f32 %v72, %v937
    %v967 = vmul.f32 %v73, %v942
    %v968 = vmul.f32 %v74, %v947
    %v969 = vmul.f32 %v75, %v952
    %v970 = vsel %vm80, %v954, 0.0
    %v971 = vsel %vm80, %v955, 0.0
    %v972 = vadd.f32 %v970, %v971
    %v973 = vrot.slane %v972, 4
    %v974 = vadd.f32 %v972, %v973
    %v975 = vrot.slane %v974, 2
    %v976 = vadd.f32 %v974, %v975
    %v977 = vrot.slane %v976, 1
    %v978 = vadd.f32 %v976, %v977
    %v979 = vsel %vm80, %v956, 0.0
    %v980 = vsel %vm80, %v957, 0.0
    %v981 = vadd.f32 %v979, %v980
    %v982 = vrot.slane %v981, 4
    %v983 = vadd.f32 %v981, %v982
    %v984 = vrot.slane %v983, 2
    %v985 = vadd.f32 %v983, %v984
    %v986 = vrot.slane %v985, 1
    %v987 = vadd.f32 %v985, %v986
    %v988 = vsel %vm80, %v958, 0.0
    %v989 = vsel %vm80, %v959, 0.0
    %v990 = vadd.f32 %v988, %v989
    %v991 = vrot.slane %v990, 4
    %v992 = vadd.f32 %v990, %v991
    %v993 = vrot.slane %v992, 2
    %v994 = vadd.f32 %v992, %v993
    %v995 = vrot.slane %v994, 1
    %v996 = vadd.f32 %v994, %v995
    %v997 = vsel %vm80, %v960, 0.0
    %v998 = vsel %vm80, %v961, 0.0
    %v999 = vadd.f32 %v997, %v998
    %v1000 = vrot.slane %v999, 4
    %v1001 = vadd.f32 %v999, %v1000
    %v1002 = vrot.slane %v1001, 2
    %v1003 = vadd.f32 %v1001, %v1002
    %v1004 = vrot.slane %v1003, 1
    %v1005 = vadd.f32 %v1003, %v1004
    %v1006 = vsel %vm80, %v962, 0.0
    %v1007 = vsel %vm80, %v963, 0.0
    %v1008 = vadd.f32 %v1006, %v1007
    %v1009 = vrot.slane %v1008, 4
    %v1010 = vadd.f32 %v1008, %v1009
    %v1011 = vrot.slane %v1010, 2
    %v1012 = vadd.f32 %v1010, %v1011
    %v1013 = vrot.slane %v1012, 1
    %v1014 = vadd.f32 %v1012, %v1013
    %v1015 = vsel %vm80, %v964, 0.0
    %v1016 = vsel %vm80, %v965, 0.0
    %v1017 = vadd.f32 %v1015, %v1016
    %v1018 = vrot.slane %v1017, 4
    %v1019 = vadd.f32 %v1017, %v1018
    %v1020 = vrot.slane %v1019, 2
    %v1021 = vadd.f32 %v1019, %v1020
    %v1022 = vrot.slane %v1021, 1
    %v1023 = vadd.f32 %v1021, %v1022
    %v1024 = vsel %vm80, %v966, 0.0
    %v1025 = vsel %vm80, %v967, 0.0
    %v1026 = vadd.f32 %v1024, %v1025
    %v1027 = vrot.slane %v1026, 4
    %v1028 = vadd.f32 %v1026, %v1027
    %v1029 = vrot.slane %v1028, 2
    %v1030 = vadd.f32 %v1028, %v1029
    %v1031 = vrot.slane %v1030, 1
    %v1032 = vadd.f32 %v1030, %v1031
    %v1033 = vsel %vm80, %v968, 0.0
    %v1034 = vsel %vm80, %v969, 0.0
    %v1035 = vadd.f32 %v1033, %v1034
    %v1036 = vrot.slane %v1035, 4
    %v1037 = vadd.f32 %v1035, %v1036
    %v1038 = vrot.slane %v1037, 2
    %v1039 = vadd.f32 %v1037, %v1038
    %v1040 = vrot.slane %v1039, 1
    %v1041 = vadd.f32 %v1039, %v1040
    %v1050 = vsel %vm561, %v987, %v978
    %v1051 = vsel %vm563, %v996, %v1050
    %v1052 = vsel %vm565, %v1005, %v1051
    %v1053 = vsel %vm567, %v1014, %v1052
    %v1054 = vsel %vm569, %v1023, %v1053
    %v1055 = vsel %vm571, %v1032, %v1054
    %v1056 = vsel %vm573, %v1041, %v1055
    %1058 = vst.msk [vmem:[#allocation8] sm:$0xff] %vm80, %v1056
    %v1059 = vlaneseq
    %v1060 = vshrl.u32 %v1059, 7
    %v1061 = vsub.s32 %v486, %v1060
    %v1062 = vrot.slane %v877, %v1061
    %v1063 = vlaneseq
    %v1064 = vshrl.u32 %v1063, 7
    %v1065 = vsub.s32 %v491, %v1064
    %v1066 = vrot.slane %v882, %v1065
    %v1067 = vsel %vm496, %v1066, %v1062
    %v1068 = vlaneseq
    %v1069 = vshrl.u32 %v1068, 7
    %v1070 = vsub.s32 %v486, %v1069
    %v1071 = vrot.slane %v887, %v1070
    %v1072 = vlaneseq
    %v1073 = vshrl.u32 %v1072, 7
    %v1074 = vsub.s32 %v491, %v1073
    %v1075 = vrot.slane %v892, %v1074
    %v1076 = vsel %vm496, %v1075, %v1071
    %v1077 = vlaneseq
    %v1078 = vshrl.u32 %v1077, 7
    %v1079 = vsub.s32 %v486, %v1078
    %v1080 = vrot.slane %v897, %v1079
    %v1081 = vlaneseq
    %v1082 = vshrl.u32 %v1081, 7
    %v1083 = vsub.s32 %v491, %v1082
    %v1084 = vrot.slane %v902, %v1083
    %v1085 = vsel %vm496, %v1084, %v1080
    %v1086 = vlaneseq
    %v1087 = vshrl.u32 %v1086, 7
    %v1088 = vsub.s32 %v486, %v1087
    %v1089 = vrot.slane %v907, %v1088
    %v1090 = vlaneseq
    %v1091 = vshrl.u32 %v1090, 7
    %v1092 = vsub.s32 %v491, %v1091
    %v1093 = vrot.slane %v912, %v1092
    %v1094 = vsel %vm496, %v1093, %v1089
    %v1095 = vlaneseq
    %v1096 = vshrl.u32 %v1095, 7
    %v1097 = vsub.s32 %v486, %v1096
    %v1098 = vrot.slane %v917, %v1097
    %v1099 = vlaneseq
    %v1100 = vshrl.u32 %v1099, 7
    %v1101 = vsub.s32 %v491, %v1100
    %v1102 = vrot.slane %v922, %v1101
    %v1103 = vsel %vm496, %v1102, %v1098
    %v1104 = vlaneseq
    %v1105 = vshrl.u32 %v1104, 7
    %v1106 = vsub.s32 %v486, %v1105
    %v1107 = vrot.slane %v927, %v1106
    %v1108 = vlaneseq
    %v1109 = vshrl.u32 %v1108, 7
    %v1110 = vsub.s32 %v491, %v1109
    %v1111 = vrot.slane %v932, %v1110
    %v1112 = vsel %vm496, %v1111, %v1107
    %v1113 = vlaneseq
    %v1114 = vshrl.u32 %v1113, 7
    %v1115 = vsub.s32 %v486, %v1114
    %v1116 = vrot.slane %v937, %v1115
    %v1117 = vlaneseq
    %v1118 = vshrl.u32 %v1117, 7
    %v1119 = vsub.s32 %v491, %v1118
    %v1120 = vrot.slane %v942, %v1119
    %v1121 = vsel %vm496, %v1120, %v1116
    %v1122 = vlaneseq
    %v1123 = vshrl.u32 %v1122, 7
    %v1124 = vsub.s32 %v486, %v1123
    %v1125 = vrot.slane %v947, %v1124
    %v1126 = vlaneseq
    %v1127 = vshrl.u32 %v1126, 7
    %v1128 = vsub.s32 %v491, %v1127
    %v1129 = vrot.slane %v952, %v1128
    %v1130 = vsel %vm496, %v1129, %v1125
    %v1131 = vsel %vm561, %v1076, %v1067
    %v1132 = vsel %vm563, %v1085, %v1131
    %v1133 = vsel %vm565, %v1094, %v1132
    %v1134 = vsel %vm567, %v1103, %v1133
    %v1135 = vsel %vm569, %v1112, %v1134
    %v1136 = vsel %vm571, %v1121, %v1135
    %v1137 = vsel %vm573, %v1130, %v1136
    %1139 = vst.msk [vmem:[#allocation9] sm:$0xff] %vm576, %v1137
    // Predicated region
    $region30: #{tpu_custom_call.1} parent=1 // pred_check
      _
    $region31: #{tpu_custom_call.1} parent=1 // pred_check_branch
      %1141 = sbr.rel (0) target = $region33
    $region32: #{tpu_custom_call.1} parent=1 // pred_region
      %s1143 = ssub.s32 128, 128
      %1144 = vsyncadd [#allocation4], %s1143
      %s1146 = sshll.u32 [#allocation8], 4
      %s1147 = int_to_ptr.vmem [resolvable:$true] %s1146
      %1149 = dma.vmem_to_hbm [thread:$0]  %s1147, 128, %s4, [#allocation4]
    $region33: #{tpu_custom_call.1} parent=1 // pred_fallthru
      _
    // Predicated region
    $region34: #{tpu_custom_call.1} parent=1 // pred_check
      _
    $region35: #{tpu_custom_call.1} parent=1 // pred_check_branch
      %1151 = sbr.rel (0) target = $region37
    $region36: #{tpu_custom_call.1} parent=1 // pred_region
      %s1153 = ssub.s32 128, 128
      %1154 = vsyncadd [#allocation10], %s1153
      %s1156 = sshll.u32 [#allocation9], 4
      %s1157 = int_to_ptr.vmem [resolvable:$true] %s1156
      %1159 = dma.vmem_to_hbm [thread:$0]  %s1157, 128, %s5, [#allocation10]
    $region37: #{tpu_custom_call.1} parent=1 // pred_fallthru
      _
    // Predicated region
    $region38: #{tpu_custom_call.1} parent=1 // pred_check
      _
    $region39: #{tpu_custom_call.1} parent=1 // pred_check_branch
      %1161 = sbr.rel (0) target = $region41
    $region40: #{tpu_custom_call.1} parent=1 // pred_region
      %1162 = dma.done [#allocation4], 128
    $region41: #{tpu_custom_call.1} parent=1 // pred_fallthru
      _
    // Predicated region
    $region42: #{tpu_custom_call.1} parent=1 // pred_check
      _
    $region43: #{tpu_custom_call.1} parent=1 // pred_check_branch
      %1164 = sbr.rel (0) target = $region45
    $region44: #{tpu_custom_call.1} parent=1 // pred_region
      %1165 = dma.done [#allocation10], 128
    $region45: #{tpu_custom_call.1} parent=1 // pred_fallthru
      _
    %1166 = vsyncpa [#allocation3], 1
    %1167 = vsyncpa [#allocation6], 1
    %1168 = vsyncpa [#allocation4], 1
    %1169 = vsyncpa [#allocation10], 1

</llo_original>
